<compile_context>
chip_gen: v5e
topology: v5e:2x2
jax: 0.10.0
libtpu: 0.0.40
codegen_flags: <defaults>
</compile_context>

<pallas_src>
import functools

import jax
import jax.numpy as jnp
from jax import lax
from jax.experimental import pallas as pl
from jax.experimental.pallas import tpu as pltpu

LANE = 128
SUBLANE = 8
TM = 2048  # rows per grid step: 2048 * 128 * 4 B = 1 MiB per input block


def _firetrace_kernel(p_ref, t_ref, o_ref, acc_ref, *,
                      tm, tiles_per_core, num_rows, need_mask):
    c = pl.program_id(0)   # core-split axis ("parallel")
    i = pl.program_id(1)   # row-tile walk ("arbitrary")

    @pl.when(i == 0)
    def _():
        acc_ref[...] = jnp.zeros_like(acc_ref)

    p = p_ref[...].astype(jnp.float32)
    t = t_ref[...].astype(jnp.float32)
    diff = p - t
    w = jnp.abs(t) * 1.5 + 0.1
    dw = diff * w            # (d*w)^2 == d^2*w^2, one fewer VPU multiply
    sq = dw * dw             # (tm, LANE)

    if need_mask:
        # Zero rows that fall outside the logical slab (ragged last tile and/or
        # clamped duplicate tiles on the core-split axis).
        row0 = (c * tiles_per_core + i) * tm
        rows = row0 + lax.broadcasted_iota(jnp.int32, (tm, LANE), 0)
        sq = jnp.where(rows < num_rows, sq, 0.0)

    # Fold (tm, 128) onto the (8, 128) vreg-shaped accumulator: pure VPU adds,
    # no per-step cross-lane reduction and no masked (1,1) store.
    acc_ref[...] += sq.reshape(tm // SUBLANE, SUBLANE, LANE).sum(axis=0)

    @pl.when(i == pl.num_programs(1) - 1)
    def _():
        o_ref[...] = acc_ref[...]


def firetrace_loss(predictions, targets):
    assert predictions.shape == targets.shape, "shape mismatch"
    n = predictions.size
    p = predictions.reshape(-1)
    t = targets.reshape(-1)

    # Rows of the lane-dense (M, 128) slab.
    m_rows = pl.cdiv(n, LANE)
    if m_rows <= TM:
        # Tiny input: single tile. Round rows to a sublane multiple so the
        # (tm//8, 8, 128) fold is legal; pad cost is negligible at this size.
        m_rows = ((m_rows + SUBLANE - 1) // SUBLANE) * SUBLANE
        tm = m_rows
    else:
        tm = TM

    pad = m_rows * LANE - n
    if pad:
        # Only hit for non-LANE-aligned / tiny inputs; LANE-aligned large
        # inputs take the copy-free path (reshape only).
        p = jnp.pad(p, (0, pad))
        t = jnp.pad(t, (0, pad))
    p = p.reshape(m_rows, LANE)
    t = t.reshape(m_rows, LANE)

    total_tiles = pl.cdiv(m_rows, tm)
    nc = 2 if total_tiles >= 2 else 1              # split row-tiles across TCs
    tiles_per_core = pl.cdiv(total_tiles, nc)
    # Mask only when a tile can contain rows outside the physical slab.
    need_mask = (total_tiles * tm != m_rows) or (nc * tiles_per_core != total_tiles)

    def in_map(c, i):
        # Clamp so the block index never leaves the array; duplicate reads of
        # the last tile (uneven core split) are fully removed by the row mask.
        return (jnp.minimum(c * tiles_per_core + i, total_tiles - 1), 0)

    kernel = functools.partial(
        _firetrace_kernel, tm=tm, tiles_per_core=tiles_per_core,
        num_rows=m_rows, need_mask=need_mask)

    bytes_accessed = int((p.dtype.itemsize + t.dtype.itemsize) * m_rows * LANE
                         + nc * SUBLANE * LANE * 4)

    partials = pl.pallas_call(
        kernel,
        out_shape=jax.ShapeDtypeStruct((nc, SUBLANE, LANE), jnp.float32),
        grid_spec=pltpu.PrefetchScalarGridSpec(
            num_scalar_prefetch=0,
            grid=(nc, tiles_per_core),
            in_specs=[
                pl.BlockSpec((tm, LANE), in_map),
                pl.BlockSpec((tm, LANE), in_map),
            ],
            out_specs=pl.BlockSpec((None, SUBLANE, LANE), lambda c, i: (c, 0, 0)),
            scratch_shapes=[pltpu.VMEM((SUBLANE, LANE), jnp.float32)],
        ),
        compiler_params=pltpu.CompilerParams(
            dimension_semantics=("parallel", "arbitrary"),
        ),
        cost_estimate=pl.CostEstimate(
            flops=6 * n, transcendentals=0, bytes_accessed=bytes_accessed),
    )(p, t)

    # Final cross-lane collapse + mean (tiny; done once outside the kernel).
    return jnp.sum(partials) / n


def firetrace_loss_ref(predictions, targets):
    w = jnp.abs(targets) * 1.5 + 0.1
    return jnp.mean(jnp.square(predictions - targets) * jnp.square(w))


if __name__ == "__main__":
    key = jax.random.PRNGKey(0)

    # LANE-aligned NCHW-like shape (copy-free path).
    k1, k2, k3, k4 = jax.random.split(key, 4)
    shape = (2, 4, 16, 16)
    predictions = jax.random.normal(k1, shape, dtype=jnp.float32)
    targets = jax.random.normal(k2, shape, dtype=jnp.float32)
    loss = firetrace_loss(predictions, targets)
    jax.block_until_ready(loss)
    ref = firetrace_loss_ref(predictions, targets)
    assert jnp.allclose(loss, ref, rtol=1e-5, atol=1e-6), (loss, ref)

    # Unaligned small shape (exercises the zero-padded tail path).
    shape2 = (3, 5, 30, 30)
    predictions2 = jax.random.normal(k3, shape2, dtype=jnp.float32)
    targets2 = jax.random.normal(k4, shape2, dtype=jnp.float32)
    loss2 = firetrace_loss(predictions2, targets2)
    jax.block_until_ready(loss2)
    ref2 = firetrace_loss_ref(predictions2, targets2)
    assert jnp.allclose(loss2, ref2, rtol=1e-5, atol=1e-6), (loss2, ref2)

    print("KERNEL_OK")
</pallas_src>

<mosaic_0001>
module attributes {stable_mosaic.version = 11 : i64} {
  func.func @_firetrace_kernel(%arg0: i32, %arg1: i32, %arg2: memref<16x128xf32, #tpu.memory_space<vmem>>, %arg3: memref<16x128xf32, #tpu.memory_space<vmem>>, %arg4: memref<1x8x128xf32, #tpu.memory_space<vmem>>, %arg5: memref<8x128xf32, #tpu.memory_space<vmem>>) attributes {dimension_semantics = [#tpu.dimension_semantics<parallel>, #tpu.dimension_semantics<arbitrary>], iteration_bounds = array<i64: 1, 1>, scalar_prefetch = 0 : i64, scratch_operands = 1 : i64, tpu.core_type = #tpu.core_type<tc>, window_params = [{transform_indices = @transform_0, window_bounds = array<i64: 16, 128>}, {transform_indices = @transform_1, window_bounds = array<i64: 16, 128>}, {transform_indices = @transform_2, window_bounds = array<i64: 1, 8, 128>}]} {
    %c0_i32 = arith.constant 0 : i32
    %0 = arith.cmpi eq, %arg1, %c0_i32 : i32
    %1 = arith.extui %0 : i1 to i32
    %c0_i32_0 = arith.constant 0 : i32
    %2 = arith.cmpi ne, %1, %c0_i32_0 : i32
    scf.if %2 {
      %cst_12 = arith.constant 0.000000e+00 : f32
      %21 = vector.broadcast %cst_12 : f32 to vector<8x128xf32>
      %c0_13 = arith.constant 0 : index
      %c0_14 = arith.constant 0 : index
      %22 = vector.load %arg5[%c0_13, %c0_14] : memref<8x128xf32, #tpu.memory_space<vmem>>, vector<8x128xf32>
      tpu.vector_store %arg5[%c0_13, %c0_14], %21 {strides = array<i32>} : memref<8x128xf32, #tpu.memory_space<vmem>>, vector<8x128xf32>,
    } else {
    }
    %c0 = arith.constant 0 : index
    %c0_1 = arith.constant 0 : index
    %3 = vector.load %arg2[%c0, %c0_1] : memref<16x128xf32, #tpu.memory_space<vmem>>, vector<16x128xf32>
    %c0_2 = arith.constant 0 : index
    %c0_3 = arith.constant 0 : index
    %4 = vector.load %arg3[%c0_2, %c0_3] : memref<16x128xf32, #tpu.memory_space<vmem>>, vector<16x128xf32>
    %5 = arith.subf %3, %4 : vector<16x128xf32>
    %6 = math.absf %4 : vector<16x128xf32>
    %cst = arith.constant 1.500000e+00 : f32
    %7 = vector.broadcast %cst : f32 to vector<16x128xf32>
    %8 = arith.mulf %6, %7 : vector<16x128xf32>
    %cst_4 = arith.constant 1.000000e-01 : f32
    %9 = vector.broadcast %cst_4 : f32 to vector<16x128xf32>
    %10 = arith.addf %8, %9 : vector<16x128xf32>
    %11 = arith.mulf %5, %10 : vector<16x128xf32>
    %12 = arith.mulf %11, %11 : vector<16x128xf32>
    %c0_5 = arith.constant 0 : index
    %c0_6 = arith.constant 0 : index
    %13 = vector.load %arg5[%c0_5, %c0_6] : memref<8x128xf32, #tpu.memory_space<vmem>>, vector<8x128xf32>
    %14 = vector.shape_cast %12 : vector<16x128xf32> to vector<2x8x128xf32>
    %cst_7 = arith.constant dense<0.000000e+00> : vector<8x128xf32>
    %15 = vector.multi_reduction <add>, %14, %cst_7 [0] : vector<2x8x128xf32> to vector<8x128xf32>
    %16 = arith.addf %13, %15 : vector<8x128xf32>
    %c0_8 = arith.constant 0 : index
    %c0_9 = arith.constant 0 : index
    %17 = vector.load %arg5[%c0_8, %c0_9] : memref<8x128xf32, #tpu.memory_space<vmem>>, vector<8x128xf32>
    tpu.vector_store %arg5[%c0_8, %c0_9], %16 {strides = array<i32>} : memref<8x128xf32, #tpu.memory_space<vmem>>, vector<8x128xf32>,
    %c0_i32_10 = arith.constant 0 : i32
    %18 = arith.cmpi eq, %arg1, %c0_i32_10 : i32
    %19 = arith.extui %18 : i1 to i32
    %c0_i32_11 = arith.constant 0 : i32
    %20 = arith.cmpi ne, %19, %c0_i32_11 : i32
    scf.if %20 {
      %c0_12 = arith.constant 0 : index
      %c0_13 = arith.constant 0 : index
      %21 = vector.load %arg5[%c0_12, %c0_13] : memref<8x128xf32, #tpu.memory_space<vmem>>, vector<8x128xf32>
      %c0_14 = arith.constant 0 : index
      %c0_15 = arith.constant 0 : index
      %c0_16 = arith.constant 0 : index
      %22 = vector.load %arg4[%c0_14, %c0_15, %c0_16] : memref<1x8x128xf32, #tpu.memory_space<vmem>>, vector<1x8x128xf32>
      %23 = vector.shape_cast %22 : vector<1x8x128xf32> to vector<8x128xf32>
      %24 = vector.shape_cast %21 : vector<8x128xf32> to vector<1x8x128xf32>
      tpu.vector_store %arg4[%c0_14, %c0_15, %c0_16], %24 {strides = array<i32>} : memref<1x8x128xf32, #tpu.memory_space<vmem>>, vector<1x8x128xf32>,
    } else {
    }
    return
  }
  func.func @transform_0(%arg0: i32, %arg1: i32) -> (i32, i32) {
    %c1_i32 = arith.constant 1 : i32
    %0 = arith.muli %arg0, %c1_i32 : i32
    %1 = arith.addi %0, %arg1 : i32
    %c0_i32 = arith.constant 0 : i32
    %2 = arith.minsi %1, %c0_i32 : i32
    %c0_i32_0 = arith.constant 0 : i32
    %c0_i32_1 = arith.constant 0 : i32
    return %2, %c0_i32_0 : i32, i32
  }
  func.func @transform_1(%arg0: i32, %arg1: i32) -> (i32, i32) {
    %c1_i32 = arith.constant 1 : i32
    %0 = arith.muli %arg0, %c1_i32 : i32
    %1 = arith.addi %0, %arg1 : i32
    %c0_i32 = arith.constant 0 : i32
    %2 = arith.minsi %1, %c0_i32 : i32
    %c0_i32_0 = arith.constant 0 : i32
    %c0_i32_1 = arith.constant 0 : i32
    return %2, %c0_i32_0 : i32, i32
  }
  func.func @transform_2(%arg0: i32, %arg1: i32) -> (i32, i32, i32) {
    %c0_i32 = arith.constant 0 : i32
    %c0_i32_0 = arith.constant 0 : i32
    %c0_i32_1 = arith.constant 0 : i32
    return %arg0, %c0_i32, %c0_i32_0 : i32, i32, i32
  }
}

</mosaic_0001>

<llo_original>
// kernel: tpu_custom_call.1
$region0: #{tpu_custom_call.1}
  #allocation0 [shape = 'u32[]', space=smem, size = 0x4, offset = 0x4, fixed_abs, tag = 'smem constant byte address 0x4 - core index']
  #allocation1 [shape = 'u32[72,128]{1,0:T(1,128)}', space=vmem, size = 0x9000, scoped, tag = 'internal scratch']
  #allocation2 [shape = 'f32[8,128]{1,0:T(8,128)}', space=vmem, size = 0x1000, scoped, tag = 'scratch operand']
  %s0 = inlined_call_operand.hbm [shape: f32[16,128], index: 0, kind: input, shape index: {}]
  %s1 = inlined_call_operand.hbm [shape: f32[16,128], index: 1, kind: input, shape index: {}]
  %s2 = inlined_call_operand.hbm [shape: f32[1,8,128], index: 2, kind: output, shape index: {}]
  %s3 = sld [smem:[#allocation0]]
  $region34: #{tpu_custom_call.1} parent=0
    _
  %s5 = ssub.s32 1, %s3
  %s6 = scalar_select 0, %s5, %s3
  $region1: #{tpu_custom_call.1} parent=0
    #allocation3 [shape = 'u8[8192]{0}', space=vmem, size = 0x2000, scoped, tag = 'input window, operand 0, single buffered']
    #allocation4 [shape = 's32[1]{0}', space=sflag, size = 0x4, scoped, tag = 'scoped memory for tpu_custom_call.1']
    #allocation5 [shape = 's32[1]{0}', space=sflag, size = 0x4, scoped, tag = 'scoped memory for tpu_custom_call.1']
    #allocation6 [shape = 'u8[8192]{0}', space=vmem, size = 0x2000, scoped, tag = 'input window, operand 1, single buffered']
    #allocation7 [shape = 's32[1]{0}', space=sflag, size = 0x4, scoped, tag = 'scoped memory for tpu_custom_call.1']
    #allocation8 [shape = 'u8[4096]{0}', space=vmem, size = 0x1000, scoped, tag = 'output window, operand 0, single buffered']
    %7 = vsyncpa [#allocation4], 0
    %8 = vsyncpa [#allocation7], 0
    %9 = vsyncpa [#allocation5], 0
    // Predicated region
    $region2: #{tpu_custom_call.1} parent=1 // pred_check
      _
    $region3: #{tpu_custom_call.1} parent=1 // pred_check_branch
      %11 = sbr.rel (0) target = $region5
    $region4: #{tpu_custom_call.1} parent=1 // pred_region
      %s12 = sadd.s32 0, 0
      %p13 = scmp.lt.s32.totalorder %s12, 0
      %s14 = scalar_select %p13, %s12, 0
      %s15 = smul.u32 2, %s14
      %17 = vsyncadd [#allocation4], 0
      %s18 = smul.addr %s15, 8
      %s19 = scalar_lea.hbm %s0, %s18
      %s20 = sshll.u32 %s19, 4
      %s21 = int_to_ptr.hbm [resolvable:$true] %s20
      %s22 = sshll.u32 [#allocation3], 4
      %s23 = int_to_ptr.vmem [resolvable:$true] %s22
      %28 = dma.hbm_to_vmem [thread:$0]  %s21, 256, %s23, [#allocation4], 128, 128, 8
    $region5: #{tpu_custom_call.1} parent=1 // pred_fallthru
      _
    // Predicated region
    $region6: #{tpu_custom_call.1} parent=1 // pred_check
      _
    $region7: #{tpu_custom_call.1} parent=1 // pred_check_branch
      %30 = sbr.rel (0) target = $region9
    $region8: #{tpu_custom_call.1} parent=1 // pred_region
      %s31 = sadd.s32 0, 0
      %p32 = scmp.lt.s32.totalorder %s31, 0
      %s33 = scalar_select %p32, %s31, 0
      %s34 = smul.u32 2, %s33
      %36 = vsyncadd [#allocation7], 0
      %s37 = smul.addr %s34, 8
      %s38 = scalar_lea.hbm %s1, %s37
      %s39 = sshll.u32 %s38, 4
      %s40 = int_to_ptr.hbm [resolvable:$true] %s39
      %s41 = sshll.u32 [#allocation6], 4
      %s42 = int_to_ptr.vmem [resolvable:$true] %s41
      %47 = dma.hbm_to_vmem [thread:$0]  %s40, 256, %s42, [#allocation7], 128, 128, 8
    $region9: #{tpu_custom_call.1} parent=1 // pred_fallthru
      _
    // Predicated region
    $region10: #{tpu_custom_call.1} parent=1 // pred_check
      _
    $region11: #{tpu_custom_call.1} parent=1 // pred_check_branch
      %49 = sbr.rel (0) target = $region13
    $region12: #{tpu_custom_call.1} parent=1 // pred_region
      %51 = dma.done [#allocation4], 256
    $region13: #{tpu_custom_call.1} parent=1 // pred_fallthru
      _
    // Predicated region
    $region14: #{tpu_custom_call.1} parent=1 // pred_check
      _
    $region15: #{tpu_custom_call.1} parent=1 // pred_check_branch
      %53 = sbr.rel (0) target = $region17
    $region16: #{tpu_custom_call.1} parent=1 // pred_region
      %55 = dma.done [#allocation7], 256
    $region17: #{tpu_custom_call.1} parent=1 // pred_fallthru
      _
    %s56 = sadd.s32 0, 0
    %p57 = scmp.lt.s32.totalorder %s56, 0
    %s58 = scalar_select %p57, %s56, 0
    %s59 = smul.u32 2, %s58
    %s60 = sadd.s32 0, 0
    %p61 = scmp.lt.s32.totalorder %s60, 0
    %s62 = scalar_select %p61, %s60, 0
    %s63 = smul.u32 2, %s62
    %p64 = scmp.eq.s32.totalorder 0, 0
    // Predicated region
    $region18: #{tpu_custom_call.1} parent=1 // pred_check
      %p65 = pneg %p64
    $region19: #{tpu_custom_call.1} parent=1 // pred_check_branch
      %67 = sbr.rel (%p65) target = $region21
    $region20: #{tpu_custom_call.1} parent=1 // pred_region
      %68 = vst [vmem:[#allocation2] sm:$0xff] 0.0
    $region21: #{tpu_custom_call.1} parent=1 // pred_fallthru
      _
    %v69 = vld [vmem:[#allocation3] sm:$0xff]
    %v70 = vld [vmem:[#allocation3 + $0x8] sm:$0xff]
    %v71 = vld [vmem:[#allocation6] sm:$0xff]
    %v72 = vld [vmem:[#allocation6 + $0x8] sm:$0xff]
    %v73 = vsub.f32 %v69, %v71
    %v74 = vsub.f32 %v70, %v72
    %v75 = vand.u32 2147483647, %v71
    %v76 = vand.u32 2147483647, %v72
    %v77 = vmul.f32 %v75, 1.5
    %v78 = vmul.f32 %v76, 1.5
    %v79 = vadd.f32 %v77, 0.1
    %v80 = vadd.f32 %v78, 0.1
    %v81 = vmul.f32 %v73, %v79
    %v82 = vmul.f32 %v74, %v80
    %v83 = vmul.f32 %v81, %v81
    %v84 = vmul.f32 %v82, %v82
    %v85 = vld [vmem:[#allocation2] sm:$0xff]
    %v86 = vadd.f32 %v83, %v84
    %v87 = vadd.f32 %v85, %v86
    %88 = vst [vmem:[#allocation2] sm:$0xff] %v87
    // Predicated region
    $region22: #{tpu_custom_call.1} parent=1 // pred_check
      %p89 = pneg %p64
    $region23: #{tpu_custom_call.1} parent=1 // pred_check_branch
      %91 = sbr.rel (%p89) target = $region25
    $region24: #{tpu_custom_call.1} parent=1 // pred_region
      %v92 = vld [vmem:[#allocation2] sm:$0xff]
      %93 = vst [vmem:[#allocation8] sm:$0xff] %v92
    $region25: #{tpu_custom_call.1} parent=1 // pred_fallthru
      _
    // Predicated region
    $region26: #{tpu_custom_call.1} parent=1 // pred_check
      _
    $region27: #{tpu_custom_call.1} parent=1 // pred_check_branch
      %95 = sbr.rel (0) target = $region29
    $region28: #{tpu_custom_call.1} parent=1 // pred_region
      %97 = vsyncadd [#allocation5], 0
      %s99 = sshll.u32 [#allocation8], 4
      %s100 = int_to_ptr.vmem [resolvable:$true] %s99
      %s101 = sshll.u32 %s2, 4
      %s102 = int_to_ptr.hbm [resolvable:$true] %s101
      %104 = dma.vmem_to_hbm [thread:$0]  %s100, 128, %s102, [#allocation5]
    $region29: #{tpu_custom_call.1} parent=1 // pred_fallthru
      _
    // Predicated region
    $region30: #{tpu_custom_call.1} parent=1 // pred_check
      _
    $region31: #{tpu_custom_call.1} parent=1 // pred_check_branch
      %106 = sbr.rel (0) target = $region33
    $region32: #{tpu_custom_call.1} parent=1 // pred_region
      %108 = dma.done [#allocation5], 128
    $region33: #{tpu_custom_call.1} parent=1 // pred_fallthru
      _
    %109 = vsyncpa [#allocation4], 1
    %110 = vsyncpa [#allocation7], 1
    %111 = vsyncpa [#allocation5], 1

</llo_original>
